<compile_context>
chip_gen: v6e
topology: v6e:2x2x1
jax: 0.10.0
libtpu: 0.0.40
codegen_flags: <defaults>
</compile_context>

<pallas_src>
from functools import partial

import jax
import jax.numpy as jnp
from jax.experimental import pallas as pl
from jax.experimental.pallas import tpu as pltpu


def rnn_kernel(xp_ref, whh_ref, wfc_ref, bfc_ref, out_ref, *, seq_len):
    """Relu recurrence over pre-projected inputs + fused Linear/sigmoid head.

    xp_ref : (seq_len, batch_pad, hidden_pad) f32   pre-projected inputs
    whh_ref: (hidden_pad, hidden_pad)        bf16   W_hh^T (zero padded)
    wfc_ref: (output_dim, hidden_pad)        f32
    bfc_ref: (1, output_dim)                 f32
    out_ref: (batch_pad, output_dim)         f32
    """
    batch_pad = xp_ref.shape[1]
    hidden_pad = xp_ref.shape[2]

    # Weight-stationary: load W_hh^T once, reuse across every timestep.
    whh = whh_ref[...]                                   # (hidden_pad, hidden_pad) bf16

    # --- Serial relu recurrence: h_t = relu(xp[t] + h_{t-1} @ W_hh^T) --------
    # h is carried in f32 vregs; only the MXU operands are bf16.
    def step(t, h):
        x_t = xp_ref[t]                                  # aligned (8,128k) tile
        pre = x_t + jnp.dot(h.astype(jnp.bfloat16), whh,
                            preferred_element_type=jnp.float32)
        return jnp.maximum(pre, 0.0)                     # nonlinearity='relu'

    h0 = jnp.zeros((batch_pad, hidden_pad), jnp.float32)
    h = jax.lax.fori_loop(0, seq_len, step, h0, unroll=min(seq_len, 8))

    # --- Final Linear + sigmoid ----------------------------------------------
    if out_ref.shape[1] == 1:
        # output_dim == 1: VPU multiply + lane reduction beats an N=1 MXU pass.
        logits = jnp.sum(h * wfc_ref[...], axis=-1, keepdims=True) + bfc_ref[...]
    else:
        logits = jax.lax.dot_general(
            h, wfc_ref[...], (((1,), (1,)), ((), ())),
            preferred_element_type=jnp.float32) + bfc_ref[...]
    out_ref[...] = jax.nn.sigmoid(logits).astype(out_ref.dtype)


def _round_up(x, m):
    return ((x + m - 1) // m) * m


def rnn_forward(text, emb_table, w_ih, w_hh, b_ih, b_hh, w_fc, b_fc):
    """text: (seq_len, batch) int32. Returns (batch, output_dim) float32."""
    seq_len, batch = text.shape
    hidden_dim = w_hh.shape[0]
    output_dim = w_fc.shape[0]

    hidden_pad = _round_up(hidden_dim, 128)   # lane-dense hidden axis
    batch_pad = _round_up(batch, 8)           # sublane-aligned per-step tiles

    # ---- Fold the embedding lookup into the input projection (one-time, -----
    # cacheable across calls when parameters are fixed): gather hidden-wide
    # rows instead of emb-wide rows, so no (seq*batch, emb) matmul in-kernel.
    proj_table = (emb_table.astype(jnp.float32)
                  @ w_ih.T.astype(jnp.float32)
                  + (b_ih + b_hh).astype(jnp.float32))          # (vocab+1, hidden)
    proj_table = jnp.pad(proj_table, ((0, 0), (0, hidden_pad - hidden_dim)))

    xp = jnp.take(proj_table, text.reshape(-1), axis=0)         # (seq*batch, hid_pad)
    xp = xp.reshape(seq_len, batch, hidden_pad)
    # Zero rows for the batch pad: they stay exactly zero through the relu
    # recurrence and are sliced off after the kernel.
    xp = jnp.pad(xp, ((0, 0), (0, batch_pad - batch), (0, 0)))

    # W_hh^T, zero-padded to (hidden_pad, hidden_pad), bf16 MXU operand.
    whh = jnp.pad(w_hh.T.astype(jnp.float32),
                  ((0, hidden_pad - hidden_dim), (0, hidden_pad - hidden_dim)))
    whh = whh.astype(jnp.bfloat16)

    wfc = jnp.pad(w_fc.astype(jnp.float32),
                  ((0, 0), (0, hidden_pad - hidden_dim)))        # (out, hid_pad)
    bfc = b_fc.reshape(1, output_dim).astype(jnp.float32)

    kernel = partial(rnn_kernel, seq_len=seq_len)

    out = pl.pallas_call(
        kernel,
        out_shape=jax.ShapeDtypeStruct((batch_pad, output_dim), jnp.float32),
        grid=(1,),
        in_specs=[
            pl.BlockSpec((seq_len, batch_pad, hidden_pad), lambda i: (0, 0, 0)),
            pl.BlockSpec((hidden_pad, hidden_pad), lambda i: (0, 0)),
            pl.BlockSpec((output_dim, hidden_pad), lambda i: (0, 0)),
            pl.BlockSpec((1, output_dim), lambda i: (0, 0)),
        ],
        out_specs=pl.BlockSpec((batch_pad, output_dim), lambda i: (0, 0)),
        compiler_params=pltpu.CompilerParams(
            dimension_semantics=("arbitrary",)),
    )(xp, whh, wfc, bfc)

    return out[:batch]


def reference_forward(text, emb_table, w_ih, w_hh, b_ih, b_hh, w_fc, b_fc):
    """Pure-JAX f32 reference of the PyTorch forward (sanity check)."""
    embedded = jnp.take(emb_table, text, axis=0)
    batch = text.shape[1]
    h = jnp.zeros((batch, w_hh.shape[0]), jnp.float32)
    for t in range(text.shape[0]):
        h = jnp.maximum(embedded[t] @ w_ih.T + b_ih + h @ w_hh.T + b_hh, 0.0)
    return jax.nn.sigmoid(h @ w_fc.T + b_fc)


if __name__ == "__main__":
    # Small, deterministic shapes consistent with the module.
    input_dim = 100          # vocab size (Embedding has input_dim + 1 rows)
    embedding_dim = 200
    hidden_dim = 50
    output_dim = 1
    seq_len = 8
    batch = 4

    key = jax.random.PRNGKey(0)
    ks = jax.random.split(key, 8)

    emb_table = jax.random.normal(ks[0], (input_dim + 1, embedding_dim), jnp.float32)
    bound = 1.0 / jnp.sqrt(hidden_dim)
    w_ih = jax.random.uniform(ks[1], (hidden_dim, embedding_dim), jnp.float32, -bound, bound)
    w_hh = jax.random.uniform(ks[2], (hidden_dim, hidden_dim), jnp.float32, -bound, bound)
    b_ih = jax.random.uniform(ks[3], (hidden_dim,), jnp.float32, -bound, bound)
    b_hh = jax.random.uniform(ks[4], (hidden_dim,), jnp.float32, -bound, bound)
    w_fc = jax.random.uniform(ks[5], (output_dim, hidden_dim), jnp.float32, -bound, bound)
    b_fc = jax.random.uniform(ks[6], (output_dim,), jnp.float32, -bound, bound)

    text = jax.random.randint(ks[7], (seq_len, batch), 0, input_dim + 1, jnp.int32)

    out = rnn_forward(text, emb_table, w_ih, w_hh, b_ih, b_hh, w_fc, b_fc)
    out = jax.block_until_ready(out)

    ref = reference_forward(text, emb_table, w_ih, w_hh, b_ih, b_hh, w_fc, b_fc)
    assert out.shape == (batch, output_dim)
    # Tolerance reflects bf16 MXU operands in the recurrence (h carried in f32).
    assert jnp.allclose(out, ref, atol=1e-2, rtol=1e-2), (out, ref)

    print("KERNEL_OK")
</pallas_src>

<mosaic_0001>
module attributes {stable_mosaic.version = 11 : i64} {
  func.func @rnn_kernel(%arg0: i32, %arg1: memref<8x8x128xf32, #tpu.memory_space<vmem>>, %arg2: memref<128x128xbf16, #tpu.memory_space<vmem>>, %arg3: memref<1x128xf32, #tpu.memory_space<vmem>>, %arg4: memref<1x1xf32, #tpu.memory_space<vmem>>, %arg5: memref<8x1xf32, #tpu.memory_space<vmem>>) attributes {dimension_semantics = [#tpu.dimension_semantics<arbitrary>], iteration_bounds = array<i64: 1>, scalar_prefetch = 0 : i64, scratch_operands = 0 : i64, tpu.core_type = #tpu.core_type<tc>, window_params = [{pipeline_mode = #tpu.pipeline_mode<synchronous>, transform_indices = @transform_0, window_bounds = array<i64: 8, 8, 128>}, {pipeline_mode = #tpu.pipeline_mode<synchronous>, transform_indices = @transform_1, window_bounds = array<i64: 128, 128>}, {pipeline_mode = #tpu.pipeline_mode<synchronous>, transform_indices = @transform_2, window_bounds = array<i64: 1, 128>}, {pipeline_mode = #tpu.pipeline_mode<synchronous>, transform_indices = @transform_3, window_bounds = array<i64: 1, 1>}, {pipeline_mode = #tpu.pipeline_mode<synchronous>, transform_indices = @transform_4, window_bounds = array<i64: 8, 1>}]} {
    %c0 = arith.constant 0 : index
    %c0_0 = arith.constant 0 : index
    %0 = vector.load %arg2[%c0, %c0_0] : memref<128x128xbf16, #tpu.memory_space<vmem>>, vector<128x128xbf16>
    %cst = arith.constant 0.000000e+00 : f32
    %1 = vector.broadcast %cst : f32 to vector<8x128xf32>
    %c0_i32 = arith.constant 0 : i32
    %2 = arith.index_cast %c0_i32 : i32 to index
    %c0_1 = arith.constant 0 : index
    %c0_2 = arith.constant 0 : index
    %3 = vector.load %arg1[%2, %c0_1, %c0_2] : memref<8x8x128xf32, #tpu.memory_space<vmem>>, vector<1x8x128xf32>
    %4 = vector.shape_cast %3 : vector<1x8x128xf32> to vector<8x128xf32>
    %5 = arith.truncf %1 : vector<8x128xf32> to vector<8x128xbf16>
    %cst_3 = arith.constant dense<0.000000e+00> : vector<8x128xf32>
    %6 = tpu.matmul %5, %0, %cst_3 {dimension_numbers = #tpu.dot_dimension_numbers<[1], [0], [0], [1], [0, 0, 1, 1], [], []>} : vector<8x128xbf16>, vector<128x128xbf16>, vector<8x128xf32> -> vector<8x128xf32>
    %7 = arith.addf %4, %6 : vector<8x128xf32>
    %cst_4 = arith.constant 0.000000e+00 : f32
    %8 = vector.broadcast %cst_4 : f32 to vector<8x128xf32>
    %9 = arith.maximumf %7, %8 : vector<8x128xf32>
    %c1_i32 = arith.constant 1 : i32
    %10 = arith.index_cast %c1_i32 : i32 to index
    %c0_5 = arith.constant 0 : index
    %c0_6 = arith.constant 0 : index
    %11 = vector.load %arg1[%10, %c0_5, %c0_6] : memref<8x8x128xf32, #tpu.memory_space<vmem>>, vector<1x8x128xf32>
    %12 = vector.shape_cast %11 : vector<1x8x128xf32> to vector<8x128xf32>
    %13 = arith.truncf %9 : vector<8x128xf32> to vector<8x128xbf16>
    %cst_7 = arith.constant dense<0.000000e+00> : vector<8x128xf32>
    %14 = tpu.matmul %13, %0, %cst_7 {dimension_numbers = #tpu.dot_dimension_numbers<[1], [0], [0], [1], [0, 0, 1, 1], [], []>} : vector<8x128xbf16>, vector<128x128xbf16>, vector<8x128xf32> -> vector<8x128xf32>
    %15 = arith.addf %12, %14 : vector<8x128xf32>
    %cst_8 = arith.constant 0.000000e+00 : f32
    %16 = vector.broadcast %cst_8 : f32 to vector<8x128xf32>
    %17 = arith.maximumf %15, %16 : vector<8x128xf32>
    %c2_i32 = arith.constant 2 : i32
    %18 = arith.index_cast %c2_i32 : i32 to index
    %c0_9 = arith.constant 0 : index
    %c0_10 = arith.constant 0 : index
    %19 = vector.load %arg1[%18, %c0_9, %c0_10] : memref<8x8x128xf32, #tpu.memory_space<vmem>>, vector<1x8x128xf32>
    %20 = vector.shape_cast %19 : vector<1x8x128xf32> to vector<8x128xf32>
    %21 = arith.truncf %17 : vector<8x128xf32> to vector<8x128xbf16>
    %cst_11 = arith.constant dense<0.000000e+00> : vector<8x128xf32>
    %22 = tpu.matmul %21, %0, %cst_11 {dimension_numbers = #tpu.dot_dimension_numbers<[1], [0], [0], [1], [0, 0, 1, 1], [], []>} : vector<8x128xbf16>, vector<128x128xbf16>, vector<8x128xf32> -> vector<8x128xf32>
    %23 = arith.addf %20, %22 : vector<8x128xf32>
    %cst_12 = arith.constant 0.000000e+00 : f32
    %24 = vector.broadcast %cst_12 : f32 to vector<8x128xf32>
    %25 = arith.maximumf %23, %24 : vector<8x128xf32>
    %c3_i32 = arith.constant 3 : i32
    %26 = arith.index_cast %c3_i32 : i32 to index
    %c0_13 = arith.constant 0 : index
    %c0_14 = arith.constant 0 : index
    %27 = vector.load %arg1[%26, %c0_13, %c0_14] : memref<8x8x128xf32, #tpu.memory_space<vmem>>, vector<1x8x128xf32>
    %28 = vector.shape_cast %27 : vector<1x8x128xf32> to vector<8x128xf32>
    %29 = arith.truncf %25 : vector<8x128xf32> to vector<8x128xbf16>
    %cst_15 = arith.constant dense<0.000000e+00> : vector<8x128xf32>
    %30 = tpu.matmul %29, %0, %cst_15 {dimension_numbers = #tpu.dot_dimension_numbers<[1], [0], [0], [1], [0, 0, 1, 1], [], []>} : vector<8x128xbf16>, vector<128x128xbf16>, vector<8x128xf32> -> vector<8x128xf32>
    %31 = arith.addf %28, %30 : vector<8x128xf32>
    %cst_16 = arith.constant 0.000000e+00 : f32
    %32 = vector.broadcast %cst_16 : f32 to vector<8x128xf32>
    %33 = arith.maximumf %31, %32 : vector<8x128xf32>
    %c4_i32 = arith.constant 4 : i32
    %34 = arith.index_cast %c4_i32 : i32 to index
    %c0_17 = arith.constant 0 : index
    %c0_18 = arith.constant 0 : index
    %35 = vector.load %arg1[%34, %c0_17, %c0_18] : memref<8x8x128xf32, #tpu.memory_space<vmem>>, vector<1x8x128xf32>
    %36 = vector.shape_cast %35 : vector<1x8x128xf32> to vector<8x128xf32>
    %37 = arith.truncf %33 : vector<8x128xf32> to vector<8x128xbf16>
    %cst_19 = arith.constant dense<0.000000e+00> : vector<8x128xf32>
    %38 = tpu.matmul %37, %0, %cst_19 {dimension_numbers = #tpu.dot_dimension_numbers<[1], [0], [0], [1], [0, 0, 1, 1], [], []>} : vector<8x128xbf16>, vector<128x128xbf16>, vector<8x128xf32> -> vector<8x128xf32>
    %39 = arith.addf %36, %38 : vector<8x128xf32>
    %cst_20 = arith.constant 0.000000e+00 : f32
    %40 = vector.broadcast %cst_20 : f32 to vector<8x128xf32>
    %41 = arith.maximumf %39, %40 : vector<8x128xf32>
    %c5_i32 = arith.constant 5 : i32
    %42 = arith.index_cast %c5_i32 : i32 to index
    %c0_21 = arith.constant 0 : index
    %c0_22 = arith.constant 0 : index
    %43 = vector.load %arg1[%42, %c0_21, %c0_22] : memref<8x8x128xf32, #tpu.memory_space<vmem>>, vector<1x8x128xf32>
    %44 = vector.shape_cast %43 : vector<1x8x128xf32> to vector<8x128xf32>
    %45 = arith.truncf %41 : vector<8x128xf32> to vector<8x128xbf16>
    %cst_23 = arith.constant dense<0.000000e+00> : vector<8x128xf32>
    %46 = tpu.matmul %45, %0, %cst_23 {dimension_numbers = #tpu.dot_dimension_numbers<[1], [0], [0], [1], [0, 0, 1, 1], [], []>} : vector<8x128xbf16>, vector<128x128xbf16>, vector<8x128xf32> -> vector<8x128xf32>
    %47 = arith.addf %44, %46 : vector<8x128xf32>
    %cst_24 = arith.constant 0.000000e+00 : f32
    %48 = vector.broadcast %cst_24 : f32 to vector<8x128xf32>
    %49 = arith.maximumf %47, %48 : vector<8x128xf32>
    %c6_i32 = arith.constant 6 : i32
    %50 = arith.index_cast %c6_i32 : i32 to index
    %c0_25 = arith.constant 0 : index
    %c0_26 = arith.constant 0 : index
    %51 = vector.load %arg1[%50, %c0_25, %c0_26] : memref<8x8x128xf32, #tpu.memory_space<vmem>>, vector<1x8x128xf32>
    %52 = vector.shape_cast %51 : vector<1x8x128xf32> to vector<8x128xf32>
    %53 = arith.truncf %49 : vector<8x128xf32> to vector<8x128xbf16>
    %cst_27 = arith.constant dense<0.000000e+00> : vector<8x128xf32>
    %54 = tpu.matmul %53, %0, %cst_27 {dimension_numbers = #tpu.dot_dimension_numbers<[1], [0], [0], [1], [0, 0, 1, 1], [], []>} : vector<8x128xbf16>, vector<128x128xbf16>, vector<8x128xf32> -> vector<8x128xf32>
    %55 = arith.addf %52, %54 : vector<8x128xf32>
    %cst_28 = arith.constant 0.000000e+00 : f32
    %56 = vector.broadcast %cst_28 : f32 to vector<8x128xf32>
    %57 = arith.maximumf %55, %56 : vector<8x128xf32>
    %c7_i32 = arith.constant 7 : i32
    %58 = arith.index_cast %c7_i32 : i32 to index
    %c0_29 = arith.constant 0 : index
    %c0_30 = arith.constant 0 : index
    %59 = vector.load %arg1[%58, %c0_29, %c0_30] : memref<8x8x128xf32, #tpu.memory_space<vmem>>, vector<1x8x128xf32>
    %60 = vector.shape_cast %59 : vector<1x8x128xf32> to vector<8x128xf32>
    %61 = arith.truncf %57 : vector<8x128xf32> to vector<8x128xbf16>
    %cst_31 = arith.constant dense<0.000000e+00> : vector<8x128xf32>
    %62 = tpu.matmul %61, %0, %cst_31 {dimension_numbers = #tpu.dot_dimension_numbers<[1], [0], [0], [1], [0, 0, 1, 1], [], []>} : vector<8x128xbf16>, vector<128x128xbf16>, vector<8x128xf32> -> vector<8x128xf32>
    %63 = arith.addf %60, %62 : vector<8x128xf32>
    %cst_32 = arith.constant 0.000000e+00 : f32
    %64 = vector.broadcast %cst_32 : f32 to vector<8x128xf32>
    %65 = arith.maximumf %63, %64 : vector<8x128xf32>
    %c8_i32 = arith.constant 8 : i32
    %c0_33 = arith.constant 0 : index
    %c0_34 = arith.constant 0 : index
    %66 = vector.load %arg3[%c0_33, %c0_34] : memref<1x128xf32, #tpu.memory_space<vmem>>, vector<1x128xf32>
    %67 = vector.broadcast %66 : vector<1x128xf32> to vector<8x128xf32>
    %68 = arith.mulf %65, %67 : vector<8x128xf32>
    %cst_35 = arith.constant dense<0.000000e+00> : vector<8xf32>
    %69 = vector.multi_reduction <add>, %68, %cst_35 [1] : vector<8x128xf32> to vector<8xf32>
    %70 = vector.shape_cast %69 : vector<8xf32> to vector<8x1xf32>
    %c0_36 = arith.constant 0 : index
    %c0_37 = arith.constant 0 : index
    %71 = vector.load %arg4[%c0_36, %c0_37] : memref<1x1xf32, #tpu.memory_space<vmem>>, vector<1x1xf32>
    %72 = vector.broadcast %71 : vector<1x1xf32> to vector<8x1xf32>
    %73 = arith.addf %70, %72 : vector<8x1xf32>
    %74 = arith.negf %73 : vector<8x1xf32>
    %75 = math.exp %74 : vector<8x1xf32>
    %cst_38 = arith.constant 1.000000e+00 : f32
    %76 = vector.broadcast %cst_38 : f32 to vector<8x1xf32>
    %77 = arith.addf %76, %75 : vector<8x1xf32>
    %78 = arith.divf %76, %77 : vector<8x1xf32>
    %c0_39 = arith.constant 0 : index
    %c0_40 = arith.constant 0 : index
    %79 = vector.load %arg5[%c0_39, %c0_40] : memref<8x1xf32, #tpu.memory_space<vmem>>, vector<8x1xf32>
    tpu.vector_store %arg5[%c0_39, %c0_40], %78 {strides = array<i32>} : memref<8x1xf32, #tpu.memory_space<vmem>>, vector<8x1xf32>,
    return
  }
  func.func @transform_0(%arg0: i32) -> (i32, i32, i32) {
    %c0_i32 = arith.constant 0 : i32
    %c0_i32_0 = arith.constant 0 : i32
    %c0_i32_1 = arith.constant 0 : i32
    %c0_i32_2 = arith.constant 0 : i32
    return %c0_i32, %c0_i32_0, %c0_i32_1 : i32, i32, i32
  }
  func.func @transform_1(%arg0: i32) -> (i32, i32) {
    %c0_i32 = arith.constant 0 : i32
    %c0_i32_0 = arith.constant 0 : i32
    %c0_i32_1 = arith.constant 0 : i32
    return %c0_i32, %c0_i32_0 : i32, i32
  }
  func.func @transform_2(%arg0: i32) -> (i32, i32) {
    %c0_i32 = arith.constant 0 : i32
    %c0_i32_0 = arith.constant 0 : i32
    %c0_i32_1 = arith.constant 0 : i32
    return %c0_i32, %c0_i32_0 : i32, i32
  }
  func.func @transform_3(%arg0: i32) -> (i32, i32) {
    %c0_i32 = arith.constant 0 : i32
    %c0_i32_0 = arith.constant 0 : i32
    %c0_i32_1 = arith.constant 0 : i32
    return %c0_i32, %c0_i32_0 : i32, i32
  }
  func.func @transform_4(%arg0: i32) -> (i32, i32) {
    %c0_i32 = arith.constant 0 : i32
    %c0_i32_0 = arith.constant 0 : i32
    %c0_i32_1 = arith.constant 0 : i32
    return %c0_i32, %c0_i32_0 : i32, i32
  }
}

</mosaic_0001>

<llo_original>
// kernel: tpu_custom_call.1
$region0: #{tpu_custom_call.1}
  #allocation0 [shape = 'u32[]', space=smem, size = 0x4, offset = 0x4, fixed_abs, tag = 'smem constant byte address 0x4 - core index']
  #allocation1 [shape = 'u32[144,128]{1,0:T(1,128)}', space=vmem, size = 0x12000, scoped, tag = 'internal scratch']
  #allocation2 [shape = 'f32[1,1]{1,0:T(1,128)S(1)}', space=vmem, size = 0x200, scoped, tag = 'scoped memory for tpu_custom_call.1']
  %s0 = inlined_call_operand.hbm [shape: f32[8,8,128], index: 0, kind: input, shape index: {}]
  %s1 = inlined_call_operand.hbm [shape: bf16[128,128], index: 1, kind: input, shape index: {}]
  %s2 = inlined_call_operand.vmem [shape: f32[1,128], index: 2, kind: input, shape index: {}]
  %s3 = inlined_call_operand.<no memory space> [shape: f32[1,1], index: 3, kind: input, shape index: {}]
  %s4 = inlined_call_operand.vmem [shape: f32[8,1], index: 4, kind: output, shape index: {}]
  %s5 = sld [smem:[#allocation0]]
  $region34: #{tpu_custom_call.1} parent=0
    _
  %s7 = ssub.s32 1, %s5
  %s8 = scalar_select 0, %s7, %s5
  %v9 = vstv %s3
  %10 = vst [vmem:[#allocation2] sm:$0x1] %v9
  $region1: #{tpu_custom_call.1} parent=0
    #allocation3 [shape = 'u8[32768]{0}', space=vmem, size = 0x8000, scoped, tag = 'input window, operand 0, single buffered']
    #allocation4 [shape = 's32[1]{0}', space=sflag, size = 0x4, scoped, tag = 'scoped memory for tpu_custom_call.1']
    #allocation5 [shape = 'u8[32768]{0}', space=vmem, size = 0x8000, scoped, tag = 'input window, operand 1, single buffered']
    #allocation6 [shape = 's32[1]{0}', space=sflag, size = 0x4, scoped, tag = 'scoped memory for tpu_custom_call.1']
    %11 = vsyncpa [#allocation4], 0
    %12 = vsyncpa [#allocation6], 0
    // Predicated region
    $region2: #{tpu_custom_call.1} parent=1 // pred_check
      _
    $region3: #{tpu_custom_call.1} parent=1 // pred_check_branch
      %14 = sbr.rel (0) target = $region5
    $region4: #{tpu_custom_call.1} parent=1 // pred_region
      %s16 = ssub.s32 1024, 1024
      %17 = vsyncadd [#allocation4], %s16
      %s18 = sshll.u32 [#allocation3], 4
      %s19 = int_to_ptr.vmem [resolvable:$true] %s18
      %24 = dma.hbm_to_vmem [thread:$0]  %s0, 1024, %s19, [#allocation4], 128, 128, 8
    $region5: #{tpu_custom_call.1} parent=1 // pred_fallthru
      _
    // Predicated region
    $region6: #{tpu_custom_call.1} parent=1 // pred_check
      _
    $region7: #{tpu_custom_call.1} parent=1 // pred_check_branch
      %26 = sbr.rel (0) target = $region9
    $region8: #{tpu_custom_call.1} parent=1 // pred_region
      %s28 = ssub.s32 1024, 1024
      %29 = vsyncadd [#allocation6], %s28
      %s30 = sshll.u32 [#allocation5], 4
      %s31 = int_to_ptr.vmem [resolvable:$true] %s30
      %36 = dma.hbm_to_vmem [thread:$0]  %s1, 1024, %s31, [#allocation6], 64, 64, 4
    $region9: #{tpu_custom_call.1} parent=1 // pred_fallthru
      _
    // Predicated region
    $region10: #{tpu_custom_call.1} parent=1 // pred_check
      _
    $region11: #{tpu_custom_call.1} parent=1 // pred_check_branch
      %38 = sbr.rel (0) target = $region13
    $region12: #{tpu_custom_call.1} parent=1 // pred_region
      _
    $region13: #{tpu_custom_call.1} parent=1 // pred_fallthru
      _
    // Predicated region
    $region14: #{tpu_custom_call.1} parent=1 // pred_check
      _
    $region15: #{tpu_custom_call.1} parent=1 // pred_check_branch
      %40 = sbr.rel (0) target = $region17
    $region16: #{tpu_custom_call.1} parent=1 // pred_region
      _
    $region17: #{tpu_custom_call.1} parent=1 // pred_fallthru
      _
    // Predicated region
    $region18: #{tpu_custom_call.1} parent=1 // pred_check
      _
    $region19: #{tpu_custom_call.1} parent=1 // pred_check_branch
      %42 = sbr.rel (0) target = $region21
    $region20: #{tpu_custom_call.1} parent=1 // pred_region
      %43 = dma.done [#allocation4], 1024
    $region21: #{tpu_custom_call.1} parent=1 // pred_fallthru
      _
    // Predicated region
    $region22: #{tpu_custom_call.1} parent=1 // pred_check
      _
    $region23: #{tpu_custom_call.1} parent=1 // pred_check_branch
      %45 = sbr.rel (0) target = $region25
    $region24: #{tpu_custom_call.1} parent=1 // pred_region
      %46 = dma.done [#allocation6], 1024
    $region25: #{tpu_custom_call.1} parent=1 // pred_fallthru
      _
    %v48 = vld [vmem:[#allocation5] sm:$0xf]
    %v49 = vld [vmem:[#allocation5 + $0x4] sm:$0xf]
    %v50 = vld [vmem:[#allocation5 + $0x8] sm:$0xf]
    %v51 = vld [vmem:[#allocation5 + $0xc] sm:$0xf]
    %v52 = vld [vmem:[#allocation5 + $0x10] sm:$0xf]
    %v53 = vld [vmem:[#allocation5 + $0x14] sm:$0xf]
    %v54 = vld [vmem:[#allocation5 + $0x18] sm:$0xf]
    %v55 = vld [vmem:[#allocation5 + $0x1c] sm:$0xf]
    %v56 = vld [vmem:[#allocation5 + $0x20] sm:$0xf]
    %v57 = vld [vmem:[#allocation5 + $0x24] sm:$0xf]
    %v58 = vld [vmem:[#allocation5 + $0x28] sm:$0xf]
    %v59 = vld [vmem:[#allocation5 + $0x2c] sm:$0xf]
    %v60 = vld [vmem:[#allocation5 + $0x30] sm:$0xf]
    %v61 = vld [vmem:[#allocation5 + $0x34] sm:$0xf]
    %v62 = vld [vmem:[#allocation5 + $0x38] sm:$0xf]
    %v63 = vld [vmem:[#allocation5 + $0x3c] sm:$0xf]
    %v64 = vld [vmem:[#allocation3] sm:$0xff]
    %v81 = vunpack.c.l.b16 %v48
    %v82 = vunpack.c.l.b16 %v49
    %v83 = vunpack.c.l.b16 %v50
    %v84 = vunpack.c.l.b16 %v51
    %v85 = vunpack.c.l.b16 %v52
    %v86 = vunpack.c.l.b16 %v53
    %v87 = vunpack.c.l.b16 %v54
    %v88 = vunpack.c.l.b16 %v55
    %v89 = vunpack.c.l.b16 %v56
    %v90 = vunpack.c.l.b16 %v57
    %v91 = vunpack.c.l.b16 %v58
    %v92 = vunpack.c.l.b16 %v59
    %v93 = vunpack.c.l.b16 %v60
    %v94 = vunpack.c.l.b16 %v61
    %v95 = vunpack.c.l.b16 %v62
    %v96 = vunpack.c.l.b16 %v63
    %v97 = vpack.c.b16 %v82, %v81
    %v98 = vpack.c.b16 %v84, %v83
    %v99 = vpack.c.b16 %v86, %v85
    %v100 = vpack.c.b16 %v88, %v87
    %v101 = vpack.c.b16 %v90, %v89
    %v102 = vpack.c.b16 %v92, %v91
    %v103 = vpack.c.b16 %v94, %v93
    %v104 = vpack.c.b16 %v96, %v95
    %113 = vmatprep.subr.bf16.mxu0 0
    %114 = vmatpush1.bf16.msra.mxu0 %v104
    %115 = vmatprep.subr.bf16.mxu0 0
    %116 = vmatpush1.bf16.msra.mxu0 %v103
    %117 = vmatprep.subr.bf16.mxu0 0
    %118 = vmatpush1.bf16.msra.mxu0 %v102
    %119 = vmatprep.subr.bf16.mxu0 0
    %120 = vmatpush1.bf16.msra.mxu0 %v101
    %121 = vmatprep.subr.bf16.mxu0 0
    %122 = vmatpush1.bf16.msra.mxu0 %v100
    %123 = vmatprep.subr.bf16.mxu0 0
    %124 = vmatpush1.bf16.msra.mxu0 %v99
    %125 = vmatprep.subr.bf16.mxu0 0
    %126 = vmatpush1.bf16.msra.mxu0 %v98
    %127 = vmatprep.subr.bf16.mxu0 0
    %128 = vmatpush1.bf16.msra.mxu0 %v97
    %129 = vmatprep.subr.bf16.mxu0 0
    %130 = vmatpush2.bf16.msra.mxu0 0
    %131 = vmatprep.subr.bf16.mxu0 0
    %132 = vmatpush2.bf16.msra.mxu0 0
    %133 = vmatprep.subr.bf16.mxu0 0
    %134 = vmatpush2.bf16.msra.mxu0 0
    %135 = vmatprep.subr.bf16.mxu0 0
    %136 = vmatpush2.bf16.msra.mxu0 0
    %137 = vmatprep.subr.bf16.mxu0 0
    %138 = vmatpush2.bf16.msra.mxu0 0
    %139 = vmatprep.subr.bf16.mxu0 0
    %140 = vmatpush2.bf16.msra.mxu0 0
    %141 = vmatprep.subr.bf16.mxu0 0
    %142 = vmatpush2.bf16.msra.mxu0 0
    %143 = vmatprep.subr.bf16.mxu0 0
    %144 = vmatpush2.bf16.msra.mxu0 0
    %145 = vmatprep.mubr.bf16.mxu0 0
    %146 = vmatmul.mubr.bf16.gmra.mxu0 0
    %v147 = vpop.f32.mrf.mxu0
    %v148 = vadd.f32 0.0, %v147
    %v149 = vpop.f32.mrf.mxu0
    %v150 = vpop.f32.mrf.mxu0
    %v151 = vpop.f32.mrf.mxu0
    %152 = vdwg.mxu0
    %v153 = vadd.f32 %v64, %v148
    %v154 = vmax.f32 %v153, 0.0
    %s155 = scalar_lea.vmem [#allocation3], 8
    %v156 = vld [vmem:[%s155] sm:$0xff]
    %v157 = vpack.c.bf16 %v154, %v154
    %158 = vmatprep.subr.bf16.mxu0 0
    %159 = vmatpush1.bf16.msra.mxu0 %v104
    %160 = vmatprep.subr.bf16.mxu0 0
    %161 = vmatpush1.bf16.msra.mxu0 %v103
    %162 = vmatprep.subr.bf16.mxu0 0
    %163 = vmatpush1.bf16.msra.mxu0 %v102
    %164 = vmatprep.subr.bf16.mxu0 0
    %165 = vmatpush1.bf16.msra.mxu0 %v101
    %166 = vmatprep.subr.bf16.mxu0 0
    %167 = vmatpush1.bf16.msra.mxu0 %v100
    %168 = vmatprep.subr.bf16.mxu0 0
    %169 = vmatpush1.bf16.msra.mxu0 %v99
    %170 = vmatprep.subr.bf16.mxu0 0
    %171 = vmatpush1.bf16.msra.mxu0 %v98
    %172 = vmatprep.subr.bf16.mxu0 0
    %173 = vmatpush1.bf16.msra.mxu0 %v97
    %174 = vmatprep.subr.bf16.mxu0 0
    %175 = vmatpush2.bf16.msra.mxu0 0
    %176 = vmatprep.subr.bf16.mxu0 0
    %177 = vmatpush2.bf16.msra.mxu0 0
    %178 = vmatprep.subr.bf16.mxu0 0
    %179 = vmatpush2.bf16.msra.mxu0 0
    %180 = vmatprep.subr.bf16.mxu0 0
    %181 = vmatpush2.bf16.msra.mxu0 0
    %182 = vmatprep.subr.bf16.mxu0 0
    %183 = vmatpush2.bf16.msra.mxu0 0
    %184 = vmatprep.subr.bf16.mxu0 0
    %185 = vmatpush2.bf16.msra.mxu0 0
    %186 = vmatprep.subr.bf16.mxu0 0
    %187 = vmatpush2.bf16.msra.mxu0 0
    %188 = vmatprep.subr.bf16.mxu0 0
    %189 = vmatpush2.bf16.msra.mxu0 0
    %190 = vmatprep.mubr.bf16.mxu0 0
    %191 = vmatmul.mubr.bf16.gmra.mxu0 %v157
    %v192 = vpop.f32.mrf.mxu0
    %v193 = vadd.f32 0.0, %v192
    %v194 = vpop.f32.mrf.mxu0
    %v195 = vpop.f32.mrf.mxu0
    %v196 = vpop.f32.mrf.mxu0
    %197 = vdwg.mxu0
    %v198 = vadd.f32 %v156, %v193
    %v199 = vmax.f32 %v198, 0.0
    %s200 = scalar_lea.vmem [#allocation3], 16
    %v201 = vld [vmem:[%s200] sm:$0xff]
    %v202 = vpack.c.bf16 %v199, %v199
    %203 = vmatprep.subr.bf16.mxu0 0
    %204 = vmatpush1.bf16.msra.mxu0 %v104
    %205 = vmatprep.subr.bf16.mxu0 0
    %206 = vmatpush1.bf16.msra.mxu0 %v103
    %207 = vmatprep.subr.bf16.mxu0 0
    %208 = vmatpush1.bf16.msra.mxu0 %v102
    %209 = vmatprep.subr.bf16.mxu0 0
    %210 = vmatpush1.bf16.msra.mxu0 %v101
    %211 = vmatprep.subr.bf16.mxu0 0
    %212 = vmatpush1.bf16.msra.mxu0 %v100
    %213 = vmatprep.subr.bf16.mxu0 0
    %214 = vmatpush1.bf16.msra.mxu0 %v99
    %215 = vmatprep.subr.bf16.mxu0 0
    %216 = vmatpush1.bf16.msra.mxu0 %v98
    %217 = vmatprep.subr.bf16.mxu0 0
    %218 = vmatpush1.bf16.msra.mxu0 %v97
    %219 = vmatprep.subr.bf16.mxu0 0
    %220 = vmatpush2.bf16.msra.mxu0 0
    %221 = vmatprep.subr.bf16.mxu0 0
    %222 = vmatpush2.bf16.msra.mxu0 0
    %223 = vmatprep.subr.bf16.mxu0 0
    %224 = vmatpush2.bf16.msra.mxu0 0
    %225 = vmatprep.subr.bf16.mxu0 0
    %226 = vmatpush2.bf16.msra.mxu0 0
    %227 = vmatprep.subr.bf16.mxu0 0
    %228 = vmatpush2.bf16.msra.mxu0 0
    %229 = vmatprep.subr.bf16.mxu0 0
    %230 = vmatpush2.bf16.msra.mxu0 0
    %231 = vmatprep.subr.bf16.mxu0 0
    %232 = vmatpush2.bf16.msra.mxu0 0
    %233 = vmatprep.subr.bf16.mxu0 0
    %234 = vmatpush2.bf16.msra.mxu0 0
    %235 = vmatprep.mubr.bf16.mxu0 0
    %236 = vmatmul.mubr.bf16.gmra.mxu0 %v202
    %v237 = vpop.f32.mrf.mxu0
    %v238 = vadd.f32 0.0, %v237
    %v239 = vpop.f32.mrf.mxu0
    %v240 = vpop.f32.mrf.mxu0
    %v241 = vpop.f32.mrf.mxu0
    %242 = vdwg.mxu0
    %v243 = vadd.f32 %v201, %v238
    %v244 = vmax.f32 %v243, 0.0
    %s245 = scalar_lea.vmem [#allocation3], 24
    %v246 = vld [vmem:[%s245] sm:$0xff]
    %v247 = vpack.c.bf16 %v244, %v244
    %248 = vmatprep.subr.bf16.mxu0 0
    %249 = vmatpush1.bf16.msra.mxu0 %v104
    %250 = vmatprep.subr.bf16.mxu0 0
    %251 = vmatpush1.bf16.msra.mxu0 %v103
    %252 = vmatprep.subr.bf16.mxu0 0
    %253 = vmatpush1.bf16.msra.mxu0 %v102
    %254 = vmatprep.subr.bf16.mxu0 0
    %255 = vmatpush1.bf16.msra.mxu0 %v101
    %256 = vmatprep.subr.bf16.mxu0 0
    %257 = vmatpush1.bf16.msra.mxu0 %v100
    %258 = vmatprep.subr.bf16.mxu0 0
    %259 = vmatpush1.bf16.msra.mxu0 %v99
    %260 = vmatprep.subr.bf16.mxu0 0
    %261 = vmatpush1.bf16.msra.mxu0 %v98
    %262 = vmatprep.subr.bf16.mxu0 0
    %263 = vmatpush1.bf16.msra.mxu0 %v97
    %264 = vmatprep.subr.bf16.mxu0 0
    %265 = vmatpush2.bf16.msra.mxu0 0
    %266 = vmatprep.subr.bf16.mxu0 0
    %267 = vmatpush2.bf16.msra.mxu0 0
    %268 = vmatprep.subr.bf16.mxu0 0
    %269 = vmatpush2.bf16.msra.mxu0 0
    %270 = vmatprep.subr.bf16.mxu0 0
    %271 = vmatpush2.bf16.msra.mxu0 0
    %272 = vmatprep.subr.bf16.mxu0 0
    %273 = vmatpush2.bf16.msra.mxu0 0
    %274 = vmatprep.subr.bf16.mxu0 0
    %275 = vmatpush2.bf16.msra.mxu0 0
    %276 = vmatprep.subr.bf16.mxu0 0
    %277 = vmatpush2.bf16.msra.mxu0 0
    %278 = vmatprep.subr.bf16.mxu0 0
    %279 = vmatpush2.bf16.msra.mxu0 0
    %280 = vmatprep.mubr.bf16.mxu0 0
    %281 = vmatmul.mubr.bf16.gmra.mxu0 %v247
    %v282 = vpop.f32.mrf.mxu0
    %v283 = vadd.f32 0.0, %v282
    %v284 = vpop.f32.mrf.mxu0
    %v285 = vpop.f32.mrf.mxu0
    %v286 = vpop.f32.mrf.mxu0
    %287 = vdwg.mxu0
    %v288 = vadd.f32 %v246, %v283
    %v289 = vmax.f32 %v288, 0.0
    %s290 = scalar_lea.vmem [#allocation3], 32
    %v291 = vld [vmem:[%s290] sm:$0xff]
    %v292 = vpack.c.bf16 %v289, %v289
    %293 = vmatprep.subr.bf16.mxu0 0
    %294 = vmatpush1.bf16.msra.mxu0 %v104
    %295 = vmatprep.subr.bf16.mxu0 0
    %296 = vmatpush1.bf16.msra.mxu0 %v103
    %297 = vmatprep.subr.bf16.mxu0 0
    %298 = vmatpush1.bf16.msra.mxu0 %v102
    %299 = vmatprep.subr.bf16.mxu0 0
    %300 = vmatpush1.bf16.msra.mxu0 %v101
    %301 = vmatprep.subr.bf16.mxu0 0
    %302 = vmatpush1.bf16.msra.mxu0 %v100
    %303 = vmatprep.subr.bf16.mxu0 0
    %304 = vmatpush1.bf16.msra.mxu0 %v99
    %305 = vmatprep.subr.bf16.mxu0 0
    %306 = vmatpush1.bf16.msra.mxu0 %v98
    %307 = vmatprep.subr.bf16.mxu0 0
    %308 = vmatpush1.bf16.msra.mxu0 %v97
    %309 = vmatprep.subr.bf16.mxu0 0
    %310 = vmatpush2.bf16.msra.mxu0 0
    %311 = vmatprep.subr.bf16.mxu0 0
    %312 = vmatpush2.bf16.msra.mxu0 0
    %313 = vmatprep.subr.bf16.mxu0 0
    %314 = vmatpush2.bf16.msra.mxu0 0
    %315 = vmatprep.subr.bf16.mxu0 0
    %316 = vmatpush2.bf16.msra.mxu0 0
    %317 = vmatprep.subr.bf16.mxu0 0
    %318 = vmatpush2.bf16.msra.mxu0 0
    %319 = vmatprep.subr.bf16.mxu0 0
    %320 = vmatpush2.bf16.msra.mxu0 0
    %321 = vmatprep.subr.bf16.mxu0 0
    %322 = vmatpush2.bf16.msra.mxu0 0
    %323 = vmatprep.subr.bf16.mxu0 0
    %324 = vmatpush2.bf16.msra.mxu0 0
    %325 = vmatprep.mubr.bf16.mxu0 0
    %326 = vmatmul.mubr.bf16.gmra.mxu0 %v292
    %v327 = vpop.f32.mrf.mxu0
    %v328 = vadd.f32 0.0, %v327
    %v329 = vpop.f32.mrf.mxu0
    %v330 = vpop.f32.mrf.mxu0
    %v331 = vpop.f32.mrf.mxu0
    %332 = vdwg.mxu0
    %v333 = vadd.f32 %v291, %v328
    %v334 = vmax.f32 %v333, 0.0
    %s335 = scalar_lea.vmem [#allocation3], 40
    %v336 = vld [vmem:[%s335] sm:$0xff]
    %v337 = vpack.c.bf16 %v334, %v334
    %338 = vmatprep.subr.bf16.mxu0 0
    %339 = vmatpush1.bf16.msra.mxu0 %v104
    %340 = vmatprep.subr.bf16.mxu0 0
    %341 = vmatpush1.bf16.msra.mxu0 %v103
    %342 = vmatprep.subr.bf16.mxu0 0
    %343 = vmatpush1.bf16.msra.mxu0 %v102
    %344 = vmatprep.subr.bf16.mxu0 0
    %345 = vmatpush1.bf16.msra.mxu0 %v101
    %346 = vmatprep.subr.bf16.mxu0 0
    %347 = vmatpush1.bf16.msra.mxu0 %v100
    %348 = vmatprep.subr.bf16.mxu0 0
    %349 = vmatpush1.bf16.msra.mxu0 %v99
    %350 = vmatprep.subr.bf16.mxu0 0
    %351 = vmatpush1.bf16.msra.mxu0 %v98
    %352 = vmatprep.subr.bf16.mxu0 0
    %353 = vmatpush1.bf16.msra.mxu0 %v97
    %354 = vmatprep.subr.bf16.mxu0 0
    %355 = vmatpush2.bf16.msra.mxu0 0
    %356 = vmatprep.subr.bf16.mxu0 0
    %357 = vmatpush2.bf16.msra.mxu0 0
    %358 = vmatprep.subr.bf16.mxu0 0
    %359 = vmatpush2.bf16.msra.mxu0 0
    %360 = vmatprep.subr.bf16.mxu0 0
    %361 = vmatpush2.bf16.msra.mxu0 0
    %362 = vmatprep.subr.bf16.mxu0 0
    %363 = vmatpush2.bf16.msra.mxu0 0
    %364 = vmatprep.subr.bf16.mxu0 0
    %365 = vmatpush2.bf16.msra.mxu0 0
    %366 = vmatprep.subr.bf16.mxu0 0
    %367 = vmatpush2.bf16.msra.mxu0 0
    %368 = vmatprep.subr.bf16.mxu0 0
    %369 = vmatpush2.bf16.msra.mxu0 0
    %370 = vmatprep.mubr.bf16.mxu0 0
    %371 = vmatmul.mubr.bf16.gmra.mxu0 %v337
    %v372 = vpop.f32.mrf.mxu0
    %v373 = vadd.f32 0.0, %v372
    %v374 = vpop.f32.mrf.mxu0
    %v375 = vpop.f32.mrf.mxu0
    %v376 = vpop.f32.mrf.mxu0
    %377 = vdwg.mxu0
    %v378 = vadd.f32 %v336, %v373
    %v379 = vmax.f32 %v378, 0.0
    %s380 = scalar_lea.vmem [#allocation3], 48
    %v381 = vld [vmem:[%s380] sm:$0xff]
    %v382 = vpack.c.bf16 %v379, %v379
    %383 = vmatprep.subr.bf16.mxu0 0
    %384 = vmatpush1.bf16.msra.mxu0 %v104
    %385 = vmatprep.subr.bf16.mxu0 0
    %386 = vmatpush1.bf16.msra.mxu0 %v103
    %387 = vmatprep.subr.bf16.mxu0 0
    %388 = vmatpush1.bf16.msra.mxu0 %v102
    %389 = vmatprep.subr.bf16.mxu0 0
    %390 = vmatpush1.bf16.msra.mxu0 %v101
    %391 = vmatprep.subr.bf16.mxu0 0
    %392 = vmatpush1.bf16.msra.mxu0 %v100
    %393 = vmatprep.subr.bf16.mxu0 0
    %394 = vmatpush1.bf16.msra.mxu0 %v99
    %395 = vmatprep.subr.bf16.mxu0 0
    %396 = vmatpush1.bf16.msra.mxu0 %v98
    %397 = vmatprep.subr.bf16.mxu0 0
    %398 = vmatpush1.bf16.msra.mxu0 %v97
    %399 = vmatprep.subr.bf16.mxu0 0
    %400 = vmatpush2.bf16.msra.mxu0 0
    %401 = vmatprep.subr.bf16.mxu0 0
    %402 = vmatpush2.bf16.msra.mxu0 0
    %403 = vmatprep.subr.bf16.mxu0 0
    %404 = vmatpush2.bf16.msra.mxu0 0
    %405 = vmatprep.subr.bf16.mxu0 0
    %406 = vmatpush2.bf16.msra.mxu0 0
    %407 = vmatprep.subr.bf16.mxu0 0
    %408 = vmatpush2.bf16.msra.mxu0 0
    %409 = vmatprep.subr.bf16.mxu0 0
    %410 = vmatpush2.bf16.msra.mxu0 0
    %411 = vmatprep.subr.bf16.mxu0 0
    %412 = vmatpush2.bf16.msra.mxu0 0
    %413 = vmatprep.subr.bf16.mxu0 0
    %414 = vmatpush2.bf16.msra.mxu0 0
    %415 = vmatprep.mubr.bf16.mxu0 0
    %416 = vmatmul.mubr.bf16.gmra.mxu0 %v382
    %v417 = vpop.f32.mrf.mxu0
    %v418 = vadd.f32 0.0, %v417
    %v419 = vpop.f32.mrf.mxu0
    %v420 = vpop.f32.mrf.mxu0
    %v421 = vpop.f32.mrf.mxu0
    %422 = vdwg.mxu0
    %v423 = vadd.f32 %v381, %v418
    %v424 = vmax.f32 %v423, 0.0
    %s425 = scalar_lea.vmem [#allocation3], 56
    %v426 = vld [vmem:[%s425] sm:$0xff]
    %v427 = vpack.c.bf16 %v424, %v424
    %428 = vmatprep.subr.bf16.mxu0 0
    %429 = vmatpush1.bf16.msra.mxu0 %v104
    %430 = vmatprep.subr.bf16.mxu0 0
    %431 = vmatpush1.bf16.msra.mxu0 %v103
    %432 = vmatprep.subr.bf16.mxu0 0
    %433 = vmatpush1.bf16.msra.mxu0 %v102
    %434 = vmatprep.subr.bf16.mxu0 0
    %435 = vmatpush1.bf16.msra.mxu0 %v101
    %436 = vmatprep.subr.bf16.mxu0 0
    %437 = vmatpush1.bf16.msra.mxu0 %v100
    %438 = vmatprep.subr.bf16.mxu0 0
    %439 = vmatpush1.bf16.msra.mxu0 %v99
    %440 = vmatprep.subr.bf16.mxu0 0
    %441 = vmatpush1.bf16.msra.mxu0 %v98
    %442 = vmatprep.subr.bf16.mxu0 0
    %443 = vmatpush1.bf16.msra.mxu0 %v97
    %444 = vmatprep.subr.bf16.mxu0 0
    %445 = vmatpush2.bf16.msra.mxu0 0
    %446 = vmatprep.subr.bf16.mxu0 0
    %447 = vmatpush2.bf16.msra.mxu0 0
    %448 = vmatprep.subr.bf16.mxu0 0
    %449 = vmatpush2.bf16.msra.mxu0 0
    %450 = vmatprep.subr.bf16.mxu0 0
    %451 = vmatpush2.bf16.msra.mxu0 0
    %452 = vmatprep.subr.bf16.mxu0 0
    %453 = vmatpush2.bf16.msra.mxu0 0
    %454 = vmatprep.subr.bf16.mxu0 0
    %455 = vmatpush2.bf16.msra.mxu0 0
    %456 = vmatprep.subr.bf16.mxu0 0
    %457 = vmatpush2.bf16.msra.mxu0 0
    %458 = vmatprep.subr.bf16.mxu0 0
    %459 = vmatpush2.bf16.msra.mxu0 0
    %460 = vmatprep.mubr.bf16.mxu0 0
    %461 = vmatmul.mubr.bf16.gmra.mxu0 %v427
    %v462 = vpop.f32.mrf.mxu0
    %v463 = vadd.f32 0.0, %v462
    %v464 = vpop.f32.mrf.mxu0
    %v465 = vpop.f32.mrf.mxu0
    %v466 = vpop.f32.mrf.mxu0
    %467 = vdwg.mxu0
    %v468 = vadd.f32 %v426, %v463
    %v469 = vmax.f32 %v468, 0.0
    %v470 = vld [vmem:[%s2] sm:$0x1]
    %v472 = vlaneseq
    %v473 = vshrl.u32 %v472, 7
    %v474 = vsub.s32 0, %v473
    %v475 = vrot.slane %v470, %v474
    %v477 = vmul.f32 %v469, %v475
    %478 = vadd.xlane.f32.xlu0 %v477
    %v479 = vpop.xlane.xlu0 %478
    %v480 = vld [vmem:[#allocation2] sm:$0x1]
    %v482 = vlaneseq
    %v483 = vshrl.u32 %v482, 7
    %v484 = vsub.s32 0, %v483
    %v485 = vrot.slane %v480, %v484
    %v487 = vadd.f32 %v479, %v485
    %v488 = vxor.u32 %v487, 2147483648
    %v489 = vmul.f32 %v488, 1.442695
    %v490 = vpow.pop %v489
    %v491 = vadd.f32 %v490, 1.0
    %v492 = vrcp.pop %v491
    %v493 = vmul.f32 1.0, %v492
    %vm494 = vcmask 7168
    %495 = vst.msk [vmem:[%s4] sm:$0xff] %vm494, %v493
    // Predicated region
    $region26: #{tpu_custom_call.1} parent=1 // pred_check
      _
    $region27: #{tpu_custom_call.1} parent=1 // pred_check_branch
      %497 = sbr.rel (0) target = $region29
    $region28: #{tpu_custom_call.1} parent=1 // pred_region
      _
    $region29: #{tpu_custom_call.1} parent=1 // pred_fallthru
      _
    // Predicated region
    $region30: #{tpu_custom_call.1} parent=1 // pred_check
      _
    $region31: #{tpu_custom_call.1} parent=1 // pred_check_branch
      %499 = sbr.rel (0) target = $region33
    $region32: #{tpu_custom_call.1} parent=1 // pred_region
      _
    $region33: #{tpu_custom_call.1} parent=1 // pred_fallthru
      _
    %500 = vsyncpa [#allocation4], 1
    %501 = vsyncpa [#allocation6], 1

</llo_original>
